<compile_context>
chip_gen: v6e
topology: v6e:2x2x1
jax: 0.10.0
libtpu: 0.0.40
codegen_flags: <defaults>
</compile_context>

<pallas_src>
import functools

import jax
import jax.numpy as jnp
from jax import lax
from jax.experimental import pallas as pl
from jax.experimental.pallas import tpu as pltpu


_LANES = 128


def _cdiv(a, b):
    return -(-a // b)


def _round_up(x, m):
    return _cdiv(x, m) * m


def _focal_kernel(x_ref, t_ref, out_ref, acc_ref=None, *, gamma, s_valid,
                  tiles_per_chunk, need_mask):
    """One (C, TS, 128) logits tile + (TS, 128) target tile -> partial loss sum."""
    c_dim, ts, lanes = x_ref.shape
    j = pl.program_id(2)

    def cls(ci):
        # Leading-axis slice of the input block: a dense (TS, 128) slab.
        return x_ref[ci].astype(jnp.float32)

    # Max over classes: C-1 elementwise maxima on full-occupancy vregs.
    m = cls(0)
    for ci in range(1, c_dim):
        m = jnp.maximum(m, cls(ci))

    # Targets may arrive as uint8/int16 segmentation labels (less HBM traffic);
    # compare in int32.  Out-of-range / ignore labels are not supported, same
    # as the reference module's gather.
    t = t_ref[...].astype(jnp.int32)

    # One pass over classes: softmax denominator + masked gather of the target
    # class.  exp(z) is reused for pt -> no redundant exp on the EUP.
    sum_e = None
    zt = None
    et = None
    for ci in range(c_dim):
        z = cls(ci) - m
        e = jnp.exp(z)
        sum_e = e if sum_e is None else sum_e + e
        sel = t == ci
        zc = jnp.where(sel, z, 0.0)
        zt = zc if zt is None else zt + zc
        if gamma != 0.0:                       # pt is unused when gamma == 0
            ec = jnp.where(sel, e, 0.0)
            et = ec if et is None else et + ec

    logpt = zt - jnp.log(sum_e)                # gathered log_softmax
    if gamma == 0.0:
        loss = -logpt
    else:
        # pt = exp(logpt) without a second exp: e_t / sum_e.  Exact division
        # keeps us bit-close to the reference (pl.reciprocal(..., approx=True)
        # is a further shave if ~1e-4 relative error is acceptable).
        pt = et / sum_e
        u = 1.0 - pt
        gi = int(gamma)
        if float(gi) == float(gamma) and 0 < gi <= 8:
            w = u
            for _ in range(gi - 1):            # integer gamma: cheap VPU muls
                w = w * u
        else:
            w = jnp.power(u, gamma)
        loss = -(w * logpt)

    if need_mask:
        # Covers both the pad-to-128 lanes and a ragged last row-tile.  Cheap
        # VPU work, only emitted when the grid over-covers the spatial extent.
        base = (pl.program_id(1) * tiles_per_chunk + j) * (ts * lanes)
        row = lax.broadcasted_iota(jnp.int32, (ts, lanes), 0)
        lane = lax.broadcasted_iota(jnp.int32, (ts, lanes), 1)
        loss = jnp.where(base + row * lanes + lane < s_valid, loss, 0.0)

    if acc_ref is None:
        # Single spatial tile per (batch, chunk): reduce straight to output.
        out_ref[...] = jnp.sum(loss, keepdims=True)
    else:
        @pl.when(j == 0)
        def _():
            acc_ref[...] = jnp.zeros_like(acc_ref)

        acc_ref[...] += loss

        @pl.when(j == pl.num_programs(2) - 1)
        def _():
            out_ref[...] = jnp.sum(acc_ref[...], keepdims=True)


def focal_loss(logits, target, *, gamma=0.0, size_average=True, tile_rows=None):
    """Pallas TPU implementation of FocalLoss.forward.

    logits: (N, C, *spatial) or (M, C); target: integer class indices with
    N*prod(spatial) (or M) elements, values in [0, C).
    """
    if logits.ndim > 2:
        n, c = logits.shape[0], logits.shape[1]
        x = logits.reshape(n, c, -1)           # metadata-only reshape (no copy)
    else:
        # 2-D (M, C) path: this transpose is a real XLA HBM round trip of the
        # logits, roughly the size of the kernel's own traffic -- acceptable
        # for the small dense-classifier case.  The segmentation (ndim > 2)
        # path above never transposes.
        m_rows, c = logits.shape
        n = 1
        x = logits.T.reshape(1, c, m_rows)
    s = int(x.shape[2])

    tgt = target.reshape(n, s)
    if not (jnp.issubdtype(tgt.dtype, jnp.integer) and tgt.dtype.itemsize <= 4):
        tgt = tgt.astype(jnp.int32)            # e.g. int64 -> int32; uint8 kept as-is

    # Spatial axis -> rows of 128 lanes.  Pad (one HBM copy) only when S is not
    # a multiple of 128; tile raggedness is handled by the in-kernel mask.
    s128 = _cdiv(s, _LANES)
    s_pad = s128 * _LANES
    if s_pad != s:
        x = jnp.pad(x, ((0, 0), (0, 0), (0, s_pad - s)))
        tgt = jnp.pad(tgt, ((0, 0), (0, s_pad - s)))
    x = x.reshape(n, c, s128, _LANES)
    tgt = tgt.reshape(n, s128, _LANES)

    # ---- tile sizing under a per-generation VMEM budget -------------------
    xb = x.dtype.itemsize
    tb = tgt.dtype.itemsize
    # Per row-of-128-lanes: double-buffered logits + targets, plus f32 accumulator.
    row_bytes = 2 * c * _LANES * xb + 2 * _LANES * tb + _LANES * 4
    try:
        phys_vmem = int(pltpu.get_tpu_info().vmem_capacity_bytes)
    except Exception:
        phys_vmem = 64 << 20                   # v7x-safe fallback
    scoped = min(32 << 20, max(16 << 20, phys_vmem // 2))
    budget = scoped // 4                       # rest left for compiler temporaries
    cap_rows = max(32, min(2048, budget // row_bytes))
    if tile_rows is not None:                  # test/tuning override
        cap_rows = max(1, int(tile_rows))

    if s128 <= cap_rows:
        ts = s128                              # whole batch in a single tile
    else:
        ts = max(32, (cap_rows // 32) * 32)    # 32 | ts: safe for packed dtypes
    t_total = _cdiv(s128, ts)

    # Megacore (v7x): if a single batch would be one long sequential sweep on
    # one core, split its spatial extent into two parallel chunks.
    if n == 1 and t_total == 1 and s128 >= 64:
        ts = min(ts, _round_up(_cdiv(s128, 2), 32))
        t_total = _cdiv(s128, ts)
    n_chunks = 2 if (t_total >= 2 and t_total % 2 == 0) else 1
    t_chunk = t_total // n_chunks

    need_mask = (t_total * ts * _LANES) != s

    kernel = functools.partial(
        _focal_kernel,
        gamma=float(gamma),
        s_valid=s,
        tiles_per_chunk=t_chunk,
        need_mask=need_mask,
    )

    scratch = []
    if t_chunk > 1:
        scratch = [pltpu.VMEM((ts, _LANES), jnp.float32)]

    cost = pl.CostEstimate(
        flops=n * s * (6 * c + 12),
        transcendentals=n * s * (c + 2),
        bytes_accessed=n * s * (c * xb + tb) + n * n_chunks * 4,
    )

    vmem_limit = int(min(phys_vmem - phys_vmem // 8,
                         max(scoped, 2 * ts * row_bytes)))

    out = pl.pallas_call(
        kernel,
        out_shape=jax.ShapeDtypeStruct((n, n_chunks, 1, 1), jnp.float32),
        grid_spec=pltpu.PrefetchScalarGridSpec(
            num_scalar_prefetch=0,
            grid=(n, n_chunks, t_chunk),
            in_specs=[
                pl.BlockSpec((None, c, ts, _LANES),
                             lambda i, pp, j: (i, 0, pp * t_chunk + j, 0)),
                pl.BlockSpec((None, ts, _LANES),
                             lambda i, pp, j: (i, pp * t_chunk + j, 0)),
            ],
            out_specs=pl.BlockSpec((None, None, 1, 1),
                                   lambda i, pp, j: (i, pp, 0, 0)),
            scratch_shapes=scratch,
        ),
        compiler_params=pltpu.CompilerParams(
            dimension_semantics=("parallel", "parallel", "arbitrary"),
            vmem_limit_bytes=vmem_limit,
        ),
        cost_estimate=cost,
    )(x, tgt)

    total = jnp.sum(out)
    if size_average:
        return total / jnp.float32(n * s)
    return total


def _focal_loss_ref(logits, target, gamma=0.0, size_average=True):
    """Pure-JAX reference mirroring the PyTorch module."""
    if logits.ndim > 2:
        n, c = logits.shape[0], logits.shape[1]
        x = logits.reshape(n, c, -1).transpose(0, 2, 1).reshape(-1, c)
    else:
        x = logits
    t = target.reshape(-1).astype(jnp.int32)
    logp = jax.nn.log_softmax(x.astype(jnp.float32), axis=1)
    logpt = jnp.take_along_axis(logp, t[:, None], axis=1)[:, 0]
    pt = jnp.exp(logpt)
    loss = -1.0 * jnp.power(1.0 - pt, gamma) * logpt
    return loss.mean() if size_average else loss.sum()


if __name__ == "__main__":
    key = jax.random.PRNGKey(0)

    def check(name, logits, target, gamma, size_average, tile_rows=None,
              rtol=1e-4, atol=1e-5):
        out = focal_loss(logits, target, gamma=gamma,
                         size_average=size_average, tile_rows=tile_rows)
        out = jax.block_until_ready(out)
        ref = _focal_loss_ref(logits, target, gamma=gamma,
                              size_average=size_average)
        assert jnp.allclose(out, ref, rtol=rtol, atol=atol), (name, out, ref)

    # 1) Primary small segmentation case: N=2, C=4, 16x16, gamma=2, mean.
    k1, k2 = jax.random.split(jax.random.fold_in(key, 1))
    lg = jax.random.normal(k1, (2, 4, 16, 16), dtype=jnp.float32)
    tg = jax.random.randint(k2, (2, 16, 16), 0, 4, dtype=jnp.int32)
    check("nchw_gamma2_mean", lg, tg, 2.0, True)

    # 2) Spatial size not a multiple of 128 (pad + lane mask), gamma=0, sum.
    k1, k2 = jax.random.split(jax.random.fold_in(key, 2))
    lg = jax.random.normal(k1, (2, 4, 15, 15), dtype=jnp.float32)
    tg = jax.random.randint(k2, (2, 15, 15), 0, 4, dtype=jnp.int32)
    check("pad_lanes_gamma0_sum", lg, tg, 0.0, False)

    # 3) Multi-tile accumulation + chunked (megacore) grid + uint8 labels.
    k1, k2 = jax.random.split(jax.random.fold_in(key, 3))
    lg = jax.random.normal(k1, (1, 4, 128, 128), dtype=jnp.float32)
    tg = jax.random.randint(k2, (1, 128, 128), 0, 4,
                            dtype=jnp.int32).astype(jnp.uint8)
    check("multitile_uint8", lg, tg, 2.0, True, tile_rows=32)

    # 4) Ragged last row-tile (odd tile count) + row mask, gamma=3.
    k1, k2 = jax.random.split(jax.random.fold_in(key, 4))
    lg = jax.random.normal(k1, (1, 3, 96, 96), dtype=jnp.float32)
    tg = jax.random.randint(k2, (1, 96, 96), 0, 3, dtype=jnp.int32)
    check("ragged_tiles_gamma3", lg, tg, 3.0, True, tile_rows=32)

    # 5) 2-D (M, C) classifier path.
    k1, k2 = jax.random.split(jax.random.fold_in(key, 5))
    lg = jax.random.normal(k1, (10, 4), dtype=jnp.float32)
    tg = jax.random.randint(k2, (10,), 0, 4, dtype=jnp.int32)
    check("two_d", lg, tg, 2.0, True)

    print("KERNEL_OK")
</pallas_src>

<mosaic_0001>
module attributes {stable_mosaic.version = 11 : i64} {
  func.func @_focal_kernel(%arg0: i32, %arg1: i32, %arg2: i32, %arg3: memref<1x4x2x128xf32, #tpu.memory_space<vmem>>, %arg4: memref<1x2x128xi32, #tpu.memory_space<vmem>>, %arg5: memref<1x1x1x1xf32, #tpu.memory_space<vmem>>) attributes {dimension_semantics = [#tpu.dimension_semantics<parallel>, #tpu.dimension_semantics<parallel>, #tpu.dimension_semantics<arbitrary>], iteration_bounds = array<i64: 2, 1, 1>, scalar_prefetch = 0 : i64, scratch_operands = 0 : i64, tpu.core_type = #tpu.core_type<tc>, window_params = [{transform_indices = @transform_0, window_bounds = array<i64: 1, 4, 2, 128>}, {transform_indices = @transform_1, window_bounds = array<i64: 1, 2, 128>}, {transform_indices = @transform_2, window_bounds = array<i64: 1, 1, 1, 1>}]} {
    %c0 = arith.constant 0 : index
    %c0_0 = arith.constant 0 : index
    %c0_1 = arith.constant 0 : index
    %c0_2 = arith.constant 0 : index
    %0 = vector.load %arg3[%c0, %c0_0, %c0_1, %c0_2] : memref<1x4x2x128xf32, #tpu.memory_space<vmem>>, vector<1x1x2x128xf32>
    %1 = vector.shape_cast %0 : vector<1x1x2x128xf32> to vector<2x128xf32>
    %c0_3 = arith.constant 0 : index
    %c1 = arith.constant 1 : index
    %c0_4 = arith.constant 0 : index
    %c0_5 = arith.constant 0 : index
    %2 = vector.load %arg3[%c0_3, %c1, %c0_4, %c0_5] : memref<1x4x2x128xf32, #tpu.memory_space<vmem>>, vector<1x1x2x128xf32>
    %3 = vector.shape_cast %2 : vector<1x1x2x128xf32> to vector<2x128xf32>
    %4 = arith.maximumf %1, %3 : vector<2x128xf32>
    %c0_6 = arith.constant 0 : index
    %c2 = arith.constant 2 : index
    %c0_7 = arith.constant 0 : index
    %c0_8 = arith.constant 0 : index
    %5 = vector.load %arg3[%c0_6, %c2, %c0_7, %c0_8] : memref<1x4x2x128xf32, #tpu.memory_space<vmem>>, vector<1x1x2x128xf32>
    %6 = vector.shape_cast %5 : vector<1x1x2x128xf32> to vector<2x128xf32>
    %7 = arith.maximumf %4, %6 : vector<2x128xf32>
    %c0_9 = arith.constant 0 : index
    %c3 = arith.constant 3 : index
    %c0_10 = arith.constant 0 : index
    %c0_11 = arith.constant 0 : index
    %8 = vector.load %arg3[%c0_9, %c3, %c0_10, %c0_11] : memref<1x4x2x128xf32, #tpu.memory_space<vmem>>, vector<1x1x2x128xf32>
    %9 = vector.shape_cast %8 : vector<1x1x2x128xf32> to vector<2x128xf32>
    %10 = arith.maximumf %7, %9 : vector<2x128xf32>
    %c0_12 = arith.constant 0 : index
    %c0_13 = arith.constant 0 : index
    %c0_14 = arith.constant 0 : index
    %11 = vector.load %arg4[%c0_12, %c0_13, %c0_14] : memref<1x2x128xi32, #tpu.memory_space<vmem>>, vector<1x2x128xi32>
    %12 = vector.shape_cast %11 : vector<1x2x128xi32> to vector<2x128xi32>
    %c0_15 = arith.constant 0 : index
    %c0_16 = arith.constant 0 : index
    %c0_17 = arith.constant 0 : index
    %c0_18 = arith.constant 0 : index
    %13 = vector.load %arg3[%c0_15, %c0_16, %c0_17, %c0_18] : memref<1x4x2x128xf32, #tpu.memory_space<vmem>>, vector<1x1x2x128xf32>
    %14 = vector.shape_cast %13 : vector<1x1x2x128xf32> to vector<2x128xf32>
    %15 = arith.subf %14, %10 : vector<2x128xf32>
    %16 = math.exp %15 : vector<2x128xf32>
    %c0_i32 = arith.constant 0 : i32
    %17 = vector.broadcast %c0_i32 : i32 to vector<2x128xi32>
    %18 = arith.cmpi eq, %12, %17 : vector<2x128xi32>
    %cst = arith.constant 0.000000e+00 : f32
    %19 = vector.broadcast %cst : f32 to vector<2x128xf32>
    %20 = arith.select %18, %15, %19 : vector<2x128xi1>, vector<2x128xf32>
    %cst_19 = arith.constant 0.000000e+00 : f32
    %21 = vector.broadcast %cst_19 : f32 to vector<2x128xf32>
    %22 = arith.select %18, %16, %21 : vector<2x128xi1>, vector<2x128xf32>
    %c0_20 = arith.constant 0 : index
    %c1_21 = arith.constant 1 : index
    %c0_22 = arith.constant 0 : index
    %c0_23 = arith.constant 0 : index
    %23 = vector.load %arg3[%c0_20, %c1_21, %c0_22, %c0_23] : memref<1x4x2x128xf32, #tpu.memory_space<vmem>>, vector<1x1x2x128xf32>
    %24 = vector.shape_cast %23 : vector<1x1x2x128xf32> to vector<2x128xf32>
    %25 = arith.subf %24, %10 : vector<2x128xf32>
    %26 = math.exp %25 : vector<2x128xf32>
    %27 = arith.addf %16, %26 : vector<2x128xf32>
    %c1_i32 = arith.constant 1 : i32
    %28 = vector.broadcast %c1_i32 : i32 to vector<2x128xi32>
    %29 = arith.cmpi eq, %12, %28 : vector<2x128xi32>
    %cst_24 = arith.constant 0.000000e+00 : f32
    %30 = vector.broadcast %cst_24 : f32 to vector<2x128xf32>
    %31 = arith.select %29, %25, %30 : vector<2x128xi1>, vector<2x128xf32>
    %32 = arith.addf %20, %31 : vector<2x128xf32>
    %cst_25 = arith.constant 0.000000e+00 : f32
    %33 = vector.broadcast %cst_25 : f32 to vector<2x128xf32>
    %34 = arith.select %29, %26, %33 : vector<2x128xi1>, vector<2x128xf32>
    %35 = arith.addf %22, %34 : vector<2x128xf32>
    %c0_26 = arith.constant 0 : index
    %c2_27 = arith.constant 2 : index
    %c0_28 = arith.constant 0 : index
    %c0_29 = arith.constant 0 : index
    %36 = vector.load %arg3[%c0_26, %c2_27, %c0_28, %c0_29] : memref<1x4x2x128xf32, #tpu.memory_space<vmem>>, vector<1x1x2x128xf32>
    %37 = vector.shape_cast %36 : vector<1x1x2x128xf32> to vector<2x128xf32>
    %38 = arith.subf %37, %10 : vector<2x128xf32>
    %39 = math.exp %38 : vector<2x128xf32>
    %40 = arith.addf %27, %39 : vector<2x128xf32>
    %c2_i32 = arith.constant 2 : i32
    %41 = vector.broadcast %c2_i32 : i32 to vector<2x128xi32>
    %42 = arith.cmpi eq, %12, %41 : vector<2x128xi32>
    %cst_30 = arith.constant 0.000000e+00 : f32
    %43 = vector.broadcast %cst_30 : f32 to vector<2x128xf32>
    %44 = arith.select %42, %38, %43 : vector<2x128xi1>, vector<2x128xf32>
    %45 = arith.addf %32, %44 : vector<2x128xf32>
    %cst_31 = arith.constant 0.000000e+00 : f32
    %46 = vector.broadcast %cst_31 : f32 to vector<2x128xf32>
    %47 = arith.select %42, %39, %46 : vector<2x128xi1>, vector<2x128xf32>
    %48 = arith.addf %35, %47 : vector<2x128xf32>
    %c0_32 = arith.constant 0 : index
    %c3_33 = arith.constant 3 : index
    %c0_34 = arith.constant 0 : index
    %c0_35 = arith.constant 0 : index
    %49 = vector.load %arg3[%c0_32, %c3_33, %c0_34, %c0_35] : memref<1x4x2x128xf32, #tpu.memory_space<vmem>>, vector<1x1x2x128xf32>
    %50 = vector.shape_cast %49 : vector<1x1x2x128xf32> to vector<2x128xf32>
    %51 = arith.subf %50, %10 : vector<2x128xf32>
    %52 = math.exp %51 : vector<2x128xf32>
    %53 = arith.addf %40, %52 : vector<2x128xf32>
    %c3_i32 = arith.constant 3 : i32
    %54 = vector.broadcast %c3_i32 : i32 to vector<2x128xi32>
    %55 = arith.cmpi eq, %12, %54 : vector<2x128xi32>
    %cst_36 = arith.constant 0.000000e+00 : f32
    %56 = vector.broadcast %cst_36 : f32 to vector<2x128xf32>
    %57 = arith.select %55, %51, %56 : vector<2x128xi1>, vector<2x128xf32>
    %58 = arith.addf %45, %57 : vector<2x128xf32>
    %cst_37 = arith.constant 0.000000e+00 : f32
    %59 = vector.broadcast %cst_37 : f32 to vector<2x128xf32>
    %60 = arith.select %55, %52, %59 : vector<2x128xi1>, vector<2x128xf32>
    %61 = arith.addf %48, %60 : vector<2x128xf32>
    %62 = math.log %53 : vector<2x128xf32>
    %63 = arith.subf %58, %62 : vector<2x128xf32>
    %64 = arith.divf %61, %53 : vector<2x128xf32>
    %cst_38 = arith.constant 1.000000e+00 : f32
    %65 = vector.broadcast %cst_38 : f32 to vector<2x128xf32>
    %66 = arith.subf %65, %64 : vector<2x128xf32>
    %67 = arith.mulf %66, %66 : vector<2x128xf32>
    %68 = arith.mulf %67, %63 : vector<2x128xf32>
    %cst_39 = arith.constant 0.000000e+00 : f32
    %69 = vector.broadcast %cst_39 : f32 to vector<2x128xf32>
    %70 = arith.subf %69, %68 : vector<2x128xf32>
    %71 = vector.shape_cast %70 : vector<2x128xf32> to vector<1x2x128xf32>
    %cst_40 = arith.constant dense<0.000000e+00> : vector<1xf32>
    %72 = vector.multi_reduction <add>, %71, %cst_40 [1, 2] : vector<1x2x128xf32> to vector<1xf32>
    %73 = vector.shape_cast %72 : vector<1xf32> to vector<1x1x1xf32>
    %74 = vector.extract %73[0, 0, 0] : f32 from vector<1x1x1xf32>
    %75 = vector.broadcast %74 : f32 to vector<1x1xf32>
    %c0_41 = arith.constant 0 : index
    %c0_42 = arith.constant 0 : index
    %c0_43 = arith.constant 0 : index
    %c0_44 = arith.constant 0 : index
    %76 = vector.load %arg5[%c0_41, %c0_42, %c0_43, %c0_44] : memref<1x1x1x1xf32, #tpu.memory_space<vmem>>, vector<1x1x1x1xf32>
    %77 = vector.shape_cast %76 : vector<1x1x1x1xf32> to vector<1x1xf32>
    %78 = vector.shape_cast %75 : vector<1x1xf32> to vector<1x1x1x1xf32>
    tpu.vector_store %arg5[%c0_41, %c0_42, %c0_43, %c0_44], %78 {strides = array<i32>} : memref<1x1x1x1xf32, #tpu.memory_space<vmem>>, vector<1x1x1x1xf32>,
    return
  }
  func.func @transform_0(%arg0: i32, %arg1: i32, %arg2: i32) -> (i32, i32, i32, i32) {
    %c1_i32 = arith.constant 1 : i32
    %0 = arith.muli %arg1, %c1_i32 : i32
    %1 = arith.addi %0, %arg2 : i32
    %c0_i32 = arith.constant 0 : i32
    %c0_i32_0 = arith.constant 0 : i32
    %c0_i32_1 = arith.constant 0 : i32
    return %arg0, %c0_i32, %1, %c0_i32_0 : i32, i32, i32, i32
  }
  func.func @transform_1(%arg0: i32, %arg1: i32, %arg2: i32) -> (i32, i32, i32) {
    %c1_i32 = arith.constant 1 : i32
    %0 = arith.muli %arg1, %c1_i32 : i32
    %1 = arith.addi %0, %arg2 : i32
    %c0_i32 = arith.constant 0 : i32
    %c0_i32_0 = arith.constant 0 : i32
    return %arg0, %1, %c0_i32 : i32, i32, i32
  }
  func.func @transform_2(%arg0: i32, %arg1: i32, %arg2: i32) -> (i32, i32, i32, i32) {
    %c0_i32 = arith.constant 0 : i32
    %c0_i32_0 = arith.constant 0 : i32
    %c0_i32_1 = arith.constant 0 : i32
    return %arg0, %arg1, %c0_i32, %c0_i32_0 : i32, i32, i32, i32
  }
}

</mosaic_0001>

<llo_original>
// kernel: tpu_custom_call.1
$region0: #{tpu_custom_call.1}
  #allocation0 [shape = 'u32[]', space=smem, size = 0x4, offset = 0x4, fixed_abs, tag = 'smem constant byte address 0x4 - core index']
  #allocation1 [shape = 'u32[144,128]{1,0:T(1,128)}', space=vmem, size = 0x12000, scoped, tag = 'internal scratch']
  %s0 = inlined_call_operand.hbm [shape: f32[2,4,2,128], index: 0, kind: input, shape index: {}]
  %s1 = inlined_call_operand.hbm [shape: s32[2,2,128], index: 1, kind: input, shape index: {}]
  %s2 = inlined_call_operand.vmem [shape: f32[2,1,1,1], index: 2, kind: output, shape index: {}]
  %s3 = sld [smem:[#allocation0]]
  $region49: #{tpu_custom_call.1} parent=0
    _
  %s5 = ssub.s32 1, %s3
  %s6 = scalar_select 0, %s5, %s3
  $region1: #{tpu_custom_call.1} parent=0
    #allocation2 [shape = 'u8[8192]{0}', space=vmem, size = 0x2000, scoped, tag = 'input window, operand 0']
    #allocation3 [shape = 's32[2]{0}', space=sflag, size = 0x8, scoped, tag = 'scoped memory for tpu_custom_call.1']
    #allocation4 [shape = 'u8[2048]{0}', space=vmem, size = 0x800, scoped, tag = 'input window, operand 1']
    #allocation5 [shape = 's32[2]{0}', space=sflag, size = 0x8, scoped, tag = 'scoped memory for tpu_custom_call.1']
    %7 = vsyncpa [#allocation3], 0
    %s8 = scalar_lea.sflag [#allocation3], 1
    %9 = vsyncpa %s8, 0
    %10 = vsyncpa [#allocation5], 0
    %s11 = scalar_lea.sflag [#allocation5], 1
    %12 = vsyncpa %s11, 0
    loop: start=0, step=1, limit=4
    $region2: #{tpu_custom_call.1} parent=1 // loop_pre_header
      _
    $region3: #{tpu_custom_call.1} parent=1 // loop_header
      %s14 = sphi 0, %s18
      %p15 = scmp.ge.s32.totalorder %s14, 4
      %s21 = sphi 0, %s40
      %s22 = sphi 0, %s36
      %s23 = sphi 0, %s32
      %s24 = sphi 0, %s21
      %s25 = sphi 0, %s22
      %s26 = sphi 0, %s23
      %s27 = sphi 0, %s24
      %s28 = sphi 0, %s25
      %s29 = sphi 0, %s26
      %s47 = sphi 0, %s49
      %s50 = sphi 0, %s47
      %s51 = sphi 0, %s50
      %s67 = sphi 0, %s51
      %s77 = sphi 0, %s79
      %s80 = sphi 0, %s77
      %s81 = sphi 0, %s80
      %s97 = sphi 0, %s81
      %s105 = sphi 0, %s107
      %s108 = sphi 0, %s105
      %s109 = sphi 0, %s108
      %s125 = sphi 0, %s109
    $region4: #{tpu_custom_call.1} parent=1 // loop_header_branch
      %17 = sbr.rel (%p15) target = $region8
    $region5: #{tpu_custom_call.1} parent=1 // loop_body
      %s19 = ssub.s32 %s14, 1
      %s20 = ssub.s32 %s14, 2
      %s30 = sadd.s32 1, %s23
      %p31 = scmp.ge.s32.totalorder %s30, 1
      %s32 = scalar_select %p31, 0, %s30
      %s33 = sadd.s32 1, %s22
      %s34 = scalar_select %p31, %s33, %s22
      %p35 = scmp.ge.s32.totalorder %s34, 1
      %s36 = scalar_select %p35, 0, %s34
      %s37 = sadd.s32 1, %s21
      %s38 = scalar_select %p35, %s37, %s21
      %p39 = scmp.ge.s32.totalorder %s38, 2
      %s40 = scalar_select %p39, 0, %s38
      %s41 = sadd.s32 %s22, %s23
      %s42 = sadd.s32 %s36, %s32
      %s43 = ssub.s32 %s21, %s40
      %s44 = ssub.s32 %s41, %s42
      %s45 = sor.u32 %s43, %s44
      %p46 = scmp.eq.s32.totalorder %s45, 0
      %s48 = sadd.s32 %s47, 1
      %s49 = scalar_select %p46, %s47, %s48
      %p52 = pneg %p46
      %p53 = scmp.eq.s32.totalorder %s14, 1
      %p54 = por %p52, %p53
      %p55 = scmp.ne.s32.totalorder %s47, %s50
      %p56 = scmp.eq.s32.totalorder %s14, 0
      %p57 = por %p55, %p56
      %p58 = scmp.ne.s32.totalorder %s47, %s50
      %p59 = scmp.eq.s32.totalorder %s19, 1
      %p60 = por %p58, %p59
      %p61 = scmp.ne.s32.totalorder %s50, %s51
      %p62 = scmp.eq.s32.totalorder %s19, 0
      %p63 = por %p61, %p62
      %p64 = scmp.ne.s32.totalorder %s50, %s51
      %p65 = scmp.eq.s32.totalorder %s20, 1
      %p66 = por %p64, %p65
      %p68 = scmp.ne.s32.totalorder %s51, %s67
      %p69 = scmp.eq.s32.totalorder %s20, 0
      %p70 = por %p68, %p69
      %s71 = sadd.s32 %s22, %s23
      %s72 = sadd.s32 %s36, %s32
      %s73 = ssub.s32 %s21, %s40
      %s74 = ssub.s32 %s71, %s72
      %s75 = sor.u32 %s73, %s74
      %p76 = scmp.eq.s32.totalorder %s75, 0
      %s78 = sadd.s32 %s77, 1
      %s79 = scalar_select %p76, %s77, %s78
      %p82 = pneg %p76
      %p83 = scmp.eq.s32.totalorder %s14, 1
      %p84 = por %p82, %p83
      %p85 = scmp.ne.s32.totalorder %s77, %s80
      %p86 = scmp.eq.s32.totalorder %s14, 0
      %p87 = por %p85, %p86
      %p88 = scmp.ne.s32.totalorder %s77, %s80
      %p89 = scmp.eq.s32.totalorder %s19, 1
      %p90 = por %p88, %p89
      %p91 = scmp.ne.s32.totalorder %s80, %s81
      %p92 = scmp.eq.s32.totalorder %s19, 0
      %p93 = por %p91, %p92
      %p94 = scmp.ne.s32.totalorder %s80, %s81
      %p95 = scmp.eq.s32.totalorder %s20, 1
      %p96 = por %p94, %p95
      %p98 = scmp.ne.s32.totalorder %s81, %s97
      %p99 = scmp.eq.s32.totalorder %s20, 0
      %p100 = por %p98, %p99
      %s101 = ssub.s32 %s21, %s40
      %s102 = ssub.s32 %s22, %s36
      %s103 = sor.u32 %s101, %s102
      %p104 = scmp.eq.s32.totalorder %s103, 0
      %s106 = sadd.s32 %s105, 1
      %s107 = scalar_select %p104, %s105, %s106
      %p110 = pneg %p104
      %p111 = scmp.eq.s32.totalorder %s14, 1
      %p112 = por %p110, %p111
      %p113 = scmp.ne.s32.totalorder %s105, %s108
      %p114 = scmp.eq.s32.totalorder %s14, 0
      %p115 = por %p113, %p114
      %p116 = scmp.ne.s32.totalorder %s105, %s108
      %p117 = scmp.eq.s32.totalorder %s19, 1
      %p118 = por %p116, %p117
      %p119 = scmp.ne.s32.totalorder %s108, %s109
      %p120 = scmp.eq.s32.totalorder %s19, 0
      %p121 = por %p119, %p120
      %p122 = scmp.ne.s32.totalorder %s108, %s109
      %p123 = scmp.eq.s32.totalorder %s20, 1
      %p124 = por %p122, %p123
      %p126 = scmp.ne.s32.totalorder %s109, %s125
      %p127 = scmp.eq.s32.totalorder %s20, 0
      %p128 = por %p126, %p127
      %p129 = scmp.le.s32.totalorder 1, %s14
      %p130 = scmp.lt.s32.totalorder %s14, 3
      %p131 = pnand %p129, %p130
      %p132 = pneg %p131
      // Predicated region
      $region9: #{tpu_custom_call.1} parent=5 // pred_check
        _
      $region10: #{tpu_custom_call.1} parent=5 // pred_check_branch
        %134 = sbr.rel (%p131) target = $region12
      $region11: #{tpu_custom_call.1} parent=5 // pred_region
        %s135 = ssub.s32 %s14, 1
      $region12: #{tpu_custom_call.1} parent=5 // pred_fallthru
        _
      %p136 = scmp.lt.s32.totalorder %s14, 2
      // Predicated region
      $region13: #{tpu_custom_call.1} parent=5 // pred_check
        %p137 = pneg %p136
      $region14: #{tpu_custom_call.1} parent=5 // pred_check_branch
        %139 = sbr.rel (%p137) target = $region16
      $region15: #{tpu_custom_call.1} parent=5 // pred_region
        // Predicated region
        $region17: #{tpu_custom_call.1} parent=15 // pred_check
          %p140 = pneg %p57
        $region18: #{tpu_custom_call.1} parent=15 // pred_check_branch
          %142 = sbr.rel (%p140) target = $region20
        $region19: #{tpu_custom_call.1} parent=15 // pred_region
          %s143 = sand.u32 %s47, 1
          %s144 = scalar_lea.sflag [#allocation3], %s143
          %s145 = sand.u32 %s47, 1
          %s146 = smul.addr %s145, 8
          %s147 = scalar_lea.vmem [#allocation2], %s146
          %s148 = sadd.s32 %s22, %s23
          %s150 = ssub.s32 128, 128
          %151 = vsyncadd %s144, %s150
          %s152 = smul.addr %s21, 4
          %s153 = sadd.s32 %s148, %s152
          %s154 = smul.addr %s153, 32
          %s155 = scalar_lea.hbm %s0, %s154
          %s156 = sshll.u32 %s147, 4
          %s157 = int_to_ptr.vmem [resolvable:$true] %s156
          %162 = dma.hbm_to_vmem [thread:$0]  %s155, 128, %s157, %s144, 32, 32, 2
        $region20: #{tpu_custom_call.1} parent=15 // pred_fallthru
          _
        // Predicated region
        $region21: #{tpu_custom_call.1} parent=15 // pred_check
          %p163 = pneg %p87
        $region22: #{tpu_custom_call.1} parent=15 // pred_check_branch
          %165 = sbr.rel (%p163) target = $region24
        $region23: #{tpu_custom_call.1} parent=15 // pred_region
          %s166 = sand.u32 %s77, 1
          %s167 = scalar_lea.sflag [#allocation5], %s166
          %s168 = sand.u32 %s77, 1
          %s169 = smul.addr %s168, 2
          %s170 = scalar_lea.vmem [#allocation4], %s169
          %s171 = sadd.s32 %s22, %s23
          %s173 = ssub.s32 32, 32
          %174 = vsyncadd %s167, %s173
          %s175 = sadd.s32 %s171, %s21
          %s176 = smul.addr %s175, 32
          %s177 = scalar_lea.hbm %s1, %s176
          %s179 = sshll.u32 %s170, 4
          %s180 = int_to_ptr.vmem [resolvable:$true] %s179
          %182 = dma.hbm_to_vmem [thread:$0]  %s177, 32, %s180, %s167
        $region24: #{tpu_custom_call.1} parent=15 // pred_fallthru
          _
      $region16: #{tpu_custom_call.1} parent=5 // pred_fallthru
        _
      %p183 = scmp.le.s32.totalorder 1, %s14
      %p184 = scmp.lt.s32.totalorder %s14, 3
      %p185 = pnand %p183, %p184
      %p186 = pneg %p185
      // Predicated region
      $region25: #{tpu_custom_call.1} parent=5 // pred_check
        _
      $region26: #{tpu_custom_call.1} parent=5 // pred_check_branch
        %188 = sbr.rel (%p185) target = $region28
      $region27: #{tpu_custom_call.1} parent=5 // pred_region
        %s189 = ssub.s32 %s14, 1
        %s190 = sand.u32 %s50, 1
        %s191 = scalar_lea.sflag [#allocation3], %s190
        %s192 = sand.u32 %s50, 1
        %s193 = smul.addr %s192, 8
        %s194 = scalar_lea.vmem [#allocation2], %s193
        // Predicated region
        $region29: #{tpu_custom_call.1} parent=27 // pred_check
          %p195 = pneg %p63
        $region30: #{tpu_custom_call.1} parent=27 // pred_check_branch
          %197 = sbr.rel (%p195) target = $region32
        $region31: #{tpu_custom_call.1} parent=27 // pred_region
          %198 = dma.done %s191, 128
        $region32: #{tpu_custom_call.1} parent=27 // pred_fallthru
          _
        %s199 = sand.u32 %s80, 1
        %s200 = scalar_lea.sflag [#allocation5], %s199
        %s201 = sand.u32 %s80, 1
        %s202 = smul.addr %s201, 2
        %s203 = scalar_lea.vmem [#allocation4], %s202
        // Predicated region
        $region33: #{tpu_custom_call.1} parent=27 // pred_check
          %p204 = pneg %p93
        $region34: #{tpu_custom_call.1} parent=27 // pred_check_branch
          %206 = sbr.rel (%p204) target = $region36
        $region35: #{tpu_custom_call.1} parent=27 // pred_region
          %207 = dma.done %s200, 32
        $region36: #{tpu_custom_call.1} parent=27 // pred_fallthru
          _
        %s208 = sand.u32 %s50, 1
        %s209 = scalar_lea.sflag [#allocation3], %s208
        %s210 = sand.u32 %s50, 1
        %s211 = smul.addr %s210, 8
        %s212 = scalar_lea.vmem [#allocation2], %s211
        %p213 = pneg %p63
        %p214 = pneg %p60
        %s215 = sand.u32 %s80, 1
        %s216 = scalar_lea.sflag [#allocation5], %s215
        %s217 = sand.u32 %s80, 1
        %s218 = smul.addr %s217, 2
        %s219 = scalar_lea.vmem [#allocation4], %s218
        %p220 = pneg %p93
        %p221 = pneg %p90
        %p222 = pneg %p121
        %p223 = pneg %p118
        %p224 = scmp.lt.s32.totalorder %s24, 1
        %s225 = scalar_select %p224, %s24, 1
        %p226 = scmp.lt.s32.totalorder %s25, 0
        %s227 = scalar_select %p226, %s25, 0
        %s228 = sadd.s32 %s227, %s225
        %s229 = scalar_lea.vmem %s2, %s228
        %s230 = sadd.s32 %s25, %s26
        %s231 = sadd.s32 %s25, %s26
        %p232 = scmp.lt.s32.totalorder %s24, 1
        %s233 = scalar_select %p232, %s24, 1
        %p234 = scmp.lt.s32.totalorder %s25, 0
        %s235 = scalar_select %p234, %s25, 0
        %s236 = sadd.s32 %s235, %s233
        %s237 = scalar_lea.vmem %s2, %s236
        %v238 = vld [vmem:[%s194] sm:$0x3]
        %s239 = scalar_lea.vmem %s194, 2 [#allocation2]
        %v240 = vld [vmem:[%s239] sm:$0x3]
        %v241 = vmax.f32 %v238, %v240
        %s242 = scalar_lea.vmem %s194, 4 [#allocation2]
        %v243 = vld [vmem:[%s242] sm:$0x3]
        %v244 = vmax.f32 %v241, %v243
        %s245 = scalar_lea.vmem %s194, 6 [#allocation2]
        %v246 = vld [vmem:[%s245] sm:$0x3]
        %v247 = vmax.f32 %v244, %v246
        %v248 = vld [vmem:[%s203] sm:$0x3]
        %v249 = vsub.f32 %v238, %v247
        %v250 = vmul.f32 %v249, 1.442695
        %v251 = vpow.pop %v250
        %vm252 = vcmp.eq.s32.totalorder %v248, 0
        %v253 = vsel %vm252, %v249, 0.0
        %v254 = vsel %vm252, %v251, 0.0
        %v255 = vsub.f32 %v240, %v247
        %v256 = vmul.f32 %v255, 1.442695
        %v257 = vpow.pop %v256
        %v258 = vadd.f32 %v251, %v257
        %vm259 = vcmp.eq.s32.totalorder %v248, 1
        %v260 = vsel %vm259, %v255, 0.0
        %v261 = vadd.f32 %v253, %v260
        %v262 = vsel %vm259, %v257, 0.0
        %v263 = vadd.f32 %v254, %v262
        %v264 = vsub.f32 %v243, %v247
        %v265 = vmul.f32 %v264, 1.442695
        %v266 = vpow.pop %v265
        %v267 = vadd.f32 %v258, %v266
        %vm268 = vcmp.eq.s32.totalorder %v248, 2
        %v269 = vsel %vm268, %v264, 0.0
        %v270 = vadd.f32 %v261, %v269
        %v271 = vsel %vm268, %v266, 0.0
        %v272 = vadd.f32 %v263, %v271
        %v273 = vsub.f32 %v246, %v247
        %v274 = vmul.f32 %v273, 1.442695
        %v275 = vpow.pop %v274
        %v276 = vadd.f32 %v267, %v275
        %vm277 = vcmp.eq.s32.totalorder %v248, 3
        %v278 = vsel %vm277, %v273, 0.0
        %v279 = vadd.f32 %v270, %v278
        %v280 = vsel %vm277, %v275, 0.0
        %v281 = vadd.f32 %v272, %v280
        %v282 = vlog2.pop %v276
        %v283 = vmul.f32 %v282, 0.6931472
        %v284 = vsub.f32 %v279, %v283
        %v285 = vrcp.pop %v276
        %v286 = vmul.f32 %v281, %v285
        %v287 = vsub.f32 1.0, %v286
        %v288 = vmul.f32 %v287, %v287
        %v289 = vmul.f32 %v288, %v284
        %v290 = vsub.f32 0.0, %v289
        %vm291 = vcmask 1041408
        %v292 = vsel %vm291, %v290, 0.0
        %293 = vadd.xlane.f32.xlu0 %v292
        %v294 = vpop.xlane.xlu0 %293
        %v295 = vrot.slane %v294, 4
        %v296 = vadd.f32 %v294, %v295
        %v297 = vrot.slane %v296, 2
        %v298 = vadd.f32 %v296, %v297
        %v299 = vrot.slane %v298, 1
        %v300 = vadd.f32 %v298, %v299
        %s301 = vtos %v300
        %v302 = vstv %s301
        %vm303 = vcmask 0
        %304 = vst.msk [vmem:[%s237] sm:$0x1] %vm303, %v302
        %p305 = scmp.lt.s32.totalorder %s24, 1
        %s306 = scalar_select %p305, %s24, 1
        %p307 = scmp.lt.s32.totalorder %s25, 0
        %s308 = scalar_select %p307, %s25, 0
        %s309 = sadd.s32 %s308, %s306
        %s310 = scalar_lea.vmem %s2, %s309
        // Predicated region
        $region37: #{tpu_custom_call.1} parent=27 // pred_check
          %p311 = pneg %p118
        $region38: #{tpu_custom_call.1} parent=27 // pred_check_branch
          %313 = sbr.rel (%p311) target = $region40
        $region39: #{tpu_custom_call.1} parent=27 // pred_region
          _
        $region40: #{tpu_custom_call.1} parent=27 // pred_fallthru
          _
      $region28: #{tpu_custom_call.1} parent=5 // pred_fallthru
        _
      %p314 = scmp.le.s32.totalorder 2, %s14
      // Predicated region
      $region41: #{tpu_custom_call.1} parent=5 // pred_check
        %p315 = pneg %p314
      $region42: #{tpu_custom_call.1} parent=5 // pred_check_branch
        %317 = sbr.rel (%p315) target = $region44
      $region43: #{tpu_custom_call.1} parent=5 // pred_region
        %s318 = ssub.s32 %s14, 2
        // Predicated region
        $region45: #{tpu_custom_call.1} parent=43 // pred_check
          %p319 = pneg %p124
        $region46: #{tpu_custom_call.1} parent=43 // pred_check_branch
          %321 = sbr.rel (%p319) target = $region48
        $region47: #{tpu_custom_call.1} parent=43 // pred_region
          %p322 = scmp.lt.s32.totalorder %s27, 1
          %s323 = scalar_select %p322, %s27, 1
          %p324 = scmp.lt.s32.totalorder %s28, 0
          %s325 = scalar_select %p324, %s28, 0
          %s326 = sadd.s32 %s325, %s323
          %s327 = scalar_lea.vmem %s2, %s326
        $region48: #{tpu_custom_call.1} parent=43 // pred_fallthru
          _
      $region44: #{tpu_custom_call.1} parent=5 // pred_fallthru
        _
    $region6: #{tpu_custom_call.1} parent=1 // loop_footer
      %s18 = sadd.s32 1, %s14
    $region7: #{tpu_custom_call.1} parent=1 // loop_footer_branch
      %13 = sbr.rel target = $region3
    $region8: #{tpu_custom_call.1} parent=1 // loop_exit
      _
    %328 = vsyncpa [#allocation3], 1
    %s329 = scalar_lea.sflag [#allocation3], 1
    %330 = vsyncpa %s329, 1
    %331 = vsyncpa [#allocation5], 1
    %s332 = scalar_lea.sflag [#allocation5], 1
    %333 = vsyncpa %s332, 1

</llo_original>
